<compile_context>
chip_gen: v7x
topology: tpu7x:2x2x1
jax: 0.10.0
libtpu: 0.0.40
codegen_flags: <defaults>
</compile_context>

<pallas_src>
import functools

import jax
import jax.numpy as jnp
from jax.experimental import pallas as pl
from jax.experimental.pallas import tpu as pltpu

EPS = 1e-5


def _batchnorm1d_kernel(x_ref, gamma_ref, beta_ref, o_ref):
    x = x_ref[...]                                    # (N, TILE_C), native dtype
    n = x.shape[0]
    inv_n = jnp.float32(1.0 / n)

    # Per-channel batch statistics, accumulated in f32 (single pass: E[x], E[x^2]).
    xf = x.astype(jnp.float32)                        # no-op for f32 inputs
    mean = jnp.sum(xf, axis=0, keepdims=True) * inv_n           # (1, TILE_C)
    mean_sq = jnp.sum(xf * xf, axis=0, keepdims=True) * inv_n   # (1, TILE_C)
    var = jnp.maximum(mean_sq - mean * mean, 0.0)               # biased variance

    inv_std = jax.lax.rsqrt(var + EPS)                          # (1, TILE_C), EUP
    scale = inv_std * gamma_ref[...]                            # fold affine (per-channel)
    shift = beta_ref[...] - mean * scale

    out_dt = o_ref.dtype
    # One multiply + one add per element in the output pass; (1, TILE_C) broadcasts.
    o_ref[...] = (x * scale.astype(out_dt) + shift.astype(out_dt)).astype(out_dt)


def _choose_tile_c(n, c, itemsize, vmem_budget_bytes=24 * 1024 * 1024):
    """Largest lane-dense channel tile whose double-buffered x+out fits the budget."""
    if c <= 512:
        return c  # full-extent block (required anyway when C < 128)
    # 2 input buffers + 2 output buffers of (N, TILE_C); gamma/beta are negligible.
    max_tile = vmem_budget_bytes // (4 * n * itemsize)
    tile = (max_tile // 128) * 128
    return max(128, min(tile, 2048, c))


@functools.partial(jax.jit, static_argnames=("tile_c",))
def batchnorm1d(x, gamma, beta, tile_c=None):
    """Training-mode BatchNorm1d forward. x: (N, C); gamma, beta: (C,)."""
    N, C = x.shape
    if tile_c is None:
        tile_c = _choose_tile_c(N, C, x.dtype.itemsize)
    grid = (pl.cdiv(C, tile_c),)

    gamma2d = gamma.reshape(1, C).astype(jnp.float32)
    beta2d = beta.reshape(1, C).astype(jnp.float32)

    nbytes = x.size * x.dtype.itemsize
    cost = pl.CostEstimate(flops=5 * x.size, transcendentals=C,
                           bytes_accessed=2 * nbytes)

    return pl.pallas_call(
        _batchnorm1d_kernel,
        out_shape=jax.ShapeDtypeStruct((N, C), x.dtype),
        grid=grid,
        in_specs=[
            pl.BlockSpec((N, tile_c), lambda j: (0, j)),
            pl.BlockSpec((1, tile_c), lambda j: (0, j)),
            pl.BlockSpec((1, tile_c), lambda j: (0, j)),
        ],
        out_specs=pl.BlockSpec((N, tile_c), lambda j: (0, j)),
        compiler_params=pltpu.CompilerParams(
            dimension_semantics=("parallel",),      # shards across TCs on v7x
            vmem_limit_bytes=48 * 1024 * 1024,      # > scoped defaults, < all physical
        ),
        cost_estimate=cost,
    )(x, gamma2d, beta2d)


def batchnorm1d_ref(x, gamma, beta):
    mean = jnp.mean(x, axis=0, keepdims=True)
    var = jnp.mean((x - mean) ** 2, axis=0, keepdims=True)
    return (x - mean) / jnp.sqrt(var + EPS) * gamma + beta


if __name__ == "__main__":
    key = jax.random.PRNGKey(0)
    k1, k2 = jax.random.split(key)

    # Small shape consistent with the module: batch=8, in_dim=32.
    N, C = 8, 32
    x = jax.random.normal(k1, (N, C), dtype=jnp.float32)
    # torch.nn.BatchNorm1d default init: weight (gamma) = 1, bias (beta) = 0.
    gamma = jnp.ones((C,), dtype=jnp.float32)
    beta = jnp.zeros((C,), dtype=jnp.float32)
    # TODO(synk): running_mean / running_var buffer updates (momentum=0.1, unbiased
    # variance) are training-state side effects, not part of the forward output.

    y = batchnorm1d(x, gamma, beta)
    jax.block_until_ready(y)
    y_ref = batchnorm1d_ref(x, gamma, beta)
    assert jnp.allclose(y, y_ref, atol=1e-4, rtol=1e-4), "small-shape mismatch"

    # Larger shape to exercise the lane-dense tiled, multi-step (pipelined) grid path.
    N2, C2 = 32, 2048
    x2 = jax.random.normal(k2, (N2, C2), dtype=jnp.float32)
    gamma2 = jnp.ones((C2,), dtype=jnp.float32)
    beta2 = jnp.zeros((C2,), dtype=jnp.float32)
    y2 = batchnorm1d(x2, gamma2, beta2, tile_c=512)   # grid = (4,)
    jax.block_until_ready(y2)
    y2_ref = batchnorm1d_ref(x2, gamma2, beta2)
    assert jnp.allclose(y2, y2_ref, atol=1e-4, rtol=1e-4), "tiled-shape mismatch"

    print("KERNEL_OK")
</pallas_src>

<mosaic_0001>
module attributes {stable_mosaic.version = 11 : i64} {
  func.func @_batchnorm1d_kernel(%arg0: i32, %arg1: memref<8x32xf32, #tpu.memory_space<vmem>>, %arg2: memref<1x32xf32, #tpu.memory_space<vmem>>, %arg3: memref<1x32xf32, #tpu.memory_space<vmem>>, %arg4: memref<8x32xf32, #tpu.memory_space<vmem>>) attributes {dimension_semantics = [#tpu.dimension_semantics<parallel>], iteration_bounds = array<i64: 1>, scalar_prefetch = 0 : i64, scratch_operands = 0 : i64, tpu.core_type = #tpu.core_type<tc>, window_params = [{transform_indices = @transform_0, window_bounds = array<i64: 8, 32>}, {transform_indices = @transform_1, window_bounds = array<i64: 1, 32>}, {transform_indices = @transform_2, window_bounds = array<i64: 1, 32>}, {transform_indices = @transform_3, window_bounds = array<i64: 8, 32>}]} {
    %c0 = arith.constant 0 : index
    %c0_0 = arith.constant 0 : index
    %0 = vector.load %arg1[%c0, %c0_0] : memref<8x32xf32, #tpu.memory_space<vmem>>, vector<8x32xf32>
    %cst = arith.constant dense<0.000000e+00> : vector<32xf32>
    %1 = vector.multi_reduction <add>, %0, %cst [0] : vector<8x32xf32> to vector<32xf32>
    %2 = vector.shape_cast %1 : vector<32xf32> to vector<1x32xf32>
    %cst_1 = arith.constant 1.250000e-01 : f32
    %3 = vector.broadcast %cst_1 : f32 to vector<1x32xf32>
    %4 = arith.mulf %2, %3 : vector<1x32xf32>
    %5 = arith.mulf %0, %0 : vector<8x32xf32>
    %cst_2 = arith.constant dense<0.000000e+00> : vector<32xf32>
    %6 = vector.multi_reduction <add>, %5, %cst_2 [0] : vector<8x32xf32> to vector<32xf32>
    %7 = vector.shape_cast %6 : vector<32xf32> to vector<1x32xf32>
    %cst_3 = arith.constant 1.250000e-01 : f32
    %8 = vector.broadcast %cst_3 : f32 to vector<1x32xf32>
    %9 = arith.mulf %7, %8 : vector<1x32xf32>
    %10 = arith.mulf %4, %4 : vector<1x32xf32>
    %11 = arith.subf %9, %10 : vector<1x32xf32>
    %cst_4 = arith.constant 0.000000e+00 : f32
    %12 = vector.broadcast %cst_4 : f32 to vector<1x32xf32>
    %13 = arith.maximumf %11, %12 : vector<1x32xf32>
    %cst_5 = arith.constant 9.99999974E-6 : f32
    %14 = vector.broadcast %cst_5 : f32 to vector<1x32xf32>
    %15 = arith.addf %13, %14 : vector<1x32xf32>
    %16 = math.rsqrt %15 : vector<1x32xf32>
    %c0_6 = arith.constant 0 : index
    %c0_7 = arith.constant 0 : index
    %17 = vector.load %arg2[%c0_6, %c0_7] : memref<1x32xf32, #tpu.memory_space<vmem>>, vector<1x32xf32>
    %18 = arith.mulf %16, %17 : vector<1x32xf32>
    %c0_8 = arith.constant 0 : index
    %c0_9 = arith.constant 0 : index
    %19 = vector.load %arg3[%c0_8, %c0_9] : memref<1x32xf32, #tpu.memory_space<vmem>>, vector<1x32xf32>
    %20 = arith.mulf %4, %18 : vector<1x32xf32>
    %21 = arith.subf %19, %20 : vector<1x32xf32>
    %22 = vector.broadcast %18 : vector<1x32xf32> to vector<8x32xf32>
    %23 = arith.mulf %0, %22 : vector<8x32xf32>
    %24 = vector.broadcast %21 : vector<1x32xf32> to vector<8x32xf32>
    %25 = arith.addf %23, %24 : vector<8x32xf32>
    %c0_10 = arith.constant 0 : index
    %c0_11 = arith.constant 0 : index
    %26 = vector.load %arg4[%c0_10, %c0_11] : memref<8x32xf32, #tpu.memory_space<vmem>>, vector<8x32xf32>
    tpu.vector_store %arg4[%c0_10, %c0_11], %25 {strides = array<i32>} : memref<8x32xf32, #tpu.memory_space<vmem>>, vector<8x32xf32>,
    return
  }
  func.func @transform_0(%arg0: i32) -> (i32, i32) {
    %c0_i32 = arith.constant 0 : i32
    %c0_i32_0 = arith.constant 0 : i32
    return %c0_i32, %arg0 : i32, i32
  }
  func.func @transform_1(%arg0: i32) -> (i32, i32) {
    %c0_i32 = arith.constant 0 : i32
    %c0_i32_0 = arith.constant 0 : i32
    return %c0_i32, %arg0 : i32, i32
  }
  func.func @transform_2(%arg0: i32) -> (i32, i32) {
    %c0_i32 = arith.constant 0 : i32
    %c0_i32_0 = arith.constant 0 : i32
    return %c0_i32, %arg0 : i32, i32
  }
  func.func @transform_3(%arg0: i32) -> (i32, i32) {
    %c0_i32 = arith.constant 0 : i32
    %c0_i32_0 = arith.constant 0 : i32
    return %c0_i32, %arg0 : i32, i32
  }
}

</mosaic_0001>

<llo_original>
// kernel: batchnorm1d.1
$region0: #{batchnorm1d.1}
  #allocation0 [shape = 'u32[]', space=smem, size = 0x4, offset = 0x4, fixed_abs, tag = 'smem constant byte address 0x4 - core index']
  #allocation1 [shape = 'u32[144,128]{1,0:T(1,128)}', space=vmem, size = 0x12000, scoped, tag = 'internal scratch']
  %s0 = inlined_call_operand.hbm [shape: f32[8,32], index: 0, kind: input, shape index: {}]
  %s1 = inlined_call_operand.vmem [shape: f32[1,32], index: 1, kind: input, shape index: {}]
  %s2 = inlined_call_operand.vmem [shape: f32[1,32], index: 2, kind: input, shape index: {}]
  %s3 = inlined_call_operand.hbm [shape: f32[8,32], index: 3, kind: output, shape index: {}]
  %s4 = sld [smem:[#allocation0]]
  $region26: #{batchnorm1d.1} parent=0
    _
  %s6 = ssub.s32 1, %s4
  %s7 = scalar_select 0, %s6, %s4
  $region1: #{batchnorm1d.1} parent=0
    #allocation2 [shape = 'u8[4096]{0}', space=vmem, size = 0x1000, scoped, tag = 'input window, operand 0, single buffered']
    #allocation3 [shape = 's32[1]{0}', space=sflag, size = 0x4, scoped, tag = 'scoped memory for batchnorm1d.1']
    #allocation4 [shape = 's32[1]{0}', space=sflag, size = 0x4, scoped, tag = 'scoped memory for batchnorm1d.1']
    #allocation5 [shape = 'u8[4096]{0}', space=vmem, size = 0x1000, scoped, tag = 'output window, operand 0, single buffered']
    %8 = vsyncpa [#allocation3], 0
    %9 = vsyncpa [#allocation4], 0
    // Predicated region
    $region2: #{batchnorm1d.1} parent=1 // pred_check
      _
    $region3: #{batchnorm1d.1} parent=1 // pred_check_branch
      %11 = sbr.rel (0) target = $region5
    $region4: #{batchnorm1d.1} parent=1 // pred_region
      %s13 = ssub.s32 128, 128
      %14 = vsyncadd [#allocation3], %s13
      %s16 = sshll.u32 [#allocation2], 4
      %s17 = int_to_ptr.vmem [resolvable:$true] %s16
      %19 = dma.hbm_to_vmem [thread:$0]  %s0, 128, %s17, [#allocation3]
    $region5: #{batchnorm1d.1} parent=1 // pred_fallthru
      _
    // Predicated region
    $region6: #{batchnorm1d.1} parent=1 // pred_check
      _
    $region7: #{batchnorm1d.1} parent=1 // pred_check_branch
      %21 = sbr.rel (0) target = $region9
    $region8: #{batchnorm1d.1} parent=1 // pred_region
      _
    $region9: #{batchnorm1d.1} parent=1 // pred_fallthru
      _
    // Predicated region
    $region10: #{batchnorm1d.1} parent=1 // pred_check
      _
    $region11: #{batchnorm1d.1} parent=1 // pred_check_branch
      %23 = sbr.rel (0) target = $region13
    $region12: #{batchnorm1d.1} parent=1 // pred_region
      _
    $region13: #{batchnorm1d.1} parent=1 // pred_fallthru
      _
    // Predicated region
    $region14: #{batchnorm1d.1} parent=1 // pred_check
      _
    $region15: #{batchnorm1d.1} parent=1 // pred_check_branch
      %25 = sbr.rel (0) target = $region17
    $region16: #{batchnorm1d.1} parent=1 // pred_region
      %26 = dma.done [#allocation3], 128
    $region17: #{batchnorm1d.1} parent=1 // pred_fallthru
      _
    %v27 = vld [vmem:[#allocation2] sm:$0xff]
    %vm28 = vcmask 261120
    %v29 = vsel %vm28, %v27, 0.0
    %v30 = vrot.slane %v29, 4
    %v31 = vadd.f32 %v29, %v30
    %v32 = vrot.slane %v31, 2
    %v33 = vadd.f32 %v31, %v32
    %v34 = vrot.slane %v33, 1
    %v35 = vadd.f32 %v33, %v34
    %v36 = vmul.f32 %v35, 0.125
    %v37 = vmul.f32 %v27, %v27
    %v38 = vsel %vm28, %v37, 0.0
    %v39 = vrot.slane %v38, 4
    %v40 = vadd.f32 %v38, %v39
    %v41 = vrot.slane %v40, 2
    %v42 = vadd.f32 %v40, %v41
    %v43 = vrot.slane %v42, 1
    %v44 = vadd.f32 %v42, %v43
    %v45 = vmul.f32 %v44, 0.125
    %v46 = vmul.f32 %v36, %v36
    %v47 = vsub.f32 %v45, %v46
    %v48 = vmax.f32 %v47, 0.0
    %v49 = vadd.f32 %v48, 1e-05
    %v50 = vrsqrt.pop %v49
    %v51 = vld [vmem:[%s1] sm:$0x1]
    %v52 = vmul.f32 %v50, %v51
    %v53 = vld [vmem:[%s2] sm:$0x1]
    %v54 = vmul.f32 %v36, %v52
    %v55 = vsub.f32 %v53, %v54
    %v56 = vlaneseq
    %v57 = vshrl.u32 %v56, 7
    %v58 = vsub.s32 0, %v57
    %v59 = vrot.slane %v52, %v58
    %v60 = vmul.f32 %v27, %v59
    %v62 = vlaneseq
    %v63 = vshrl.u32 %v62, 7
    %v64 = vsub.s32 0, %v63
    %v65 = vrot.slane %v55, %v64
    %v67 = vadd.f32 %v60, %v65
    %68 = vst.msk [vmem:[#allocation5] sm:$0xff] %vm28, %v67
    // Predicated region
    $region18: #{batchnorm1d.1} parent=1 // pred_check
      _
    $region19: #{batchnorm1d.1} parent=1 // pred_check_branch
      %70 = sbr.rel (0) target = $region21
    $region20: #{batchnorm1d.1} parent=1 // pred_region
      %s72 = ssub.s32 128, 128
      %73 = vsyncadd [#allocation4], %s72
      %s75 = sshll.u32 [#allocation5], 4
      %s76 = int_to_ptr.vmem [resolvable:$true] %s75
      %78 = dma.vmem_to_hbm [thread:$0]  %s76, 128, %s3, [#allocation4]
    $region21: #{batchnorm1d.1} parent=1 // pred_fallthru
      _
    // Predicated region
    $region22: #{batchnorm1d.1} parent=1 // pred_check
      _
    $region23: #{batchnorm1d.1} parent=1 // pred_check_branch
      %80 = sbr.rel (0) target = $region25
    $region24: #{batchnorm1d.1} parent=1 // pred_region
      %81 = dma.done [#allocation4], 128
    $region25: #{batchnorm1d.1} parent=1 // pred_fallthru
      _
    %82 = vsyncpa [#allocation3], 1
    %83 = vsyncpa [#allocation4], 1

</llo_original>
